<compile_context>
chip_gen: v7x
topology: tpu7x:2x2x1
jax: 0.10.0
libtpu: 0.0.40
codegen_flags: <defaults>
</compile_context>

<pallas_src>
import functools

import jax
import jax.numpy as jnp
from jax.experimental import pallas as pl
from jax.experimental.pallas import tpu as pltpu


# ---------------------------------------------------------------------------
# Kernels
# ---------------------------------------------------------------------------

def _pool_kernel(x_ref, p_ref, *, inv_hw):
    # x_ref: (TR, T_HW) tile of the (N*C, H*W) view
    # p_ref: (TR, 1) f32 output-resident accumulator (same block across axis 1)
    j = pl.program_id(1)

    @pl.when(j == 0)
    def _():
        p_ref[...] = jnp.zeros_like(p_ref)

    # f32 accumulation of the reduction only; no full-tile f32 copy kept around.
    p_ref[...] += jnp.sum(x_ref[...].astype(jnp.float32), axis=1, keepdims=True)

    @pl.when(j == pl.num_programs(1) - 1)
    def _():
        p_ref[...] *= inv_hw


def _fc_sigmoid_kernel(p_ref, wt_ref, b_ref, s_ref):
    # p_ref: (N, C) f32 pooled means; wt_ref: (C, C) = W^T; b_ref: (1, C)
    # One batched matmul for the whole batch (amortizes MXU push/pop).
    y = jnp.dot(p_ref[...], wt_ref[...].astype(jnp.float32),
                preferred_element_type=jnp.float32) + b_ref[...].astype(jnp.float32)
    s_ref[...] = jax.nn.sigmoid(y)


def _gate_kernel(x_ref, s_ref, o_ref):
    # x_ref: (TR, T_HW) tile of x; s_ref: (TR, 1) f32 scale; o_ref: same as x.
    # Multiply stays in the input dtype (only the tiny scale is cast).
    o_ref[...] = x_ref[...] * s_ref[...].astype(o_ref.dtype)


# ---------------------------------------------------------------------------
# Wrapper
# ---------------------------------------------------------------------------

def _pick_tile(dim: int, base: int, max_tile: int) -> int:
    """Largest multiple of `base` that divides `dim`, capped at `max_tile`.
    Falls back to the full dim (always legal for a BlockSpec)."""
    if dim % base != 0:
        return dim
    best = base
    t = base
    cap = min(dim, max_tile)
    while t <= cap:
        if dim % t == 0:
            best = t
        t += base
    return best


def channel_attention(x: jax.Array, weight: jax.Array, bias: jax.Array) -> jax.Array:
    """x: (N, C, H, W); weight: (C, C) (Conv2d 1x1 weight squeezed); bias: (C,)."""
    N, C, H, W = x.shape
    HW = H * W
    R = N * C

    x2 = x.reshape(R, HW)            # lane-dense view; pure reshape of NCHW
    wt = weight.T                    # so fc does pooled @ W^T
    b2 = bias.reshape(1, C)

    TR = _pick_tile(R, 8, 256)       # sublane tile (rows = (n, c) pairs)
    T_HW = _pick_tile(HW, 128, 2048)  # lane tile (multiple of 128 when possible)

    # ---- Pass 1: global average pool -> (R, 1) f32 ------------------------
    pooled = pl.pallas_call(
        functools.partial(_pool_kernel, inv_hw=1.0 / float(HW)),
        out_shape=jax.ShapeDtypeStruct((R, 1), jnp.float32),
        grid_spec=pltpu.PrefetchScalarGridSpec(
            num_scalar_prefetch=0,
            grid=(R // TR, HW // T_HW),
            in_specs=[pl.BlockSpec((TR, T_HW), lambda i, j: (i, j))],
            out_specs=pl.BlockSpec((TR, 1), lambda i, j: (i, 0)),
        ),
        compiler_params=pltpu.CompilerParams(
            dimension_semantics=("parallel", "arbitrary")),
    )(x2)

    # ---- Pass 2: 1x1 conv (dense) + sigmoid, whole batch at once ----------
    scale = pl.pallas_call(
        _fc_sigmoid_kernel,
        out_shape=jax.ShapeDtypeStruct((N, C), jnp.float32),
    )(pooled.reshape(N, C), wt, b2)

    # ---- Pass 3: broadcast gate multiply on lane-dense tiles ---------------
    out2 = pl.pallas_call(
        _gate_kernel,
        out_shape=jax.ShapeDtypeStruct((R, HW), x.dtype),
        grid_spec=pltpu.PrefetchScalarGridSpec(
            num_scalar_prefetch=0,
            grid=(R // TR, HW // T_HW),
            in_specs=[
                pl.BlockSpec((TR, T_HW), lambda i, j: (i, j)),
                pl.BlockSpec((TR, 1), lambda i, j: (i, 0)),
            ],
            out_specs=pl.BlockSpec((TR, T_HW), lambda i, j: (i, j)),
        ),
        compiler_params=pltpu.CompilerParams(
            dimension_semantics=("parallel", "parallel")),
    )(x2, scale.reshape(R, 1))

    return out2.reshape(N, C, H, W)


# ---------------------------------------------------------------------------
# Reference + self-test
# ---------------------------------------------------------------------------

def _reference(x, weight, bias):
    s = jnp.mean(x, axis=(2, 3))                          # (N, C)
    y = s @ weight.T + bias[None, :]                      # (N, C)
    scale = jax.nn.sigmoid(y)
    return x * scale[:, :, None, None]


if __name__ == "__main__":
    key = jax.random.PRNGKey(0)
    kx, kw, kb = jax.random.split(key, 3)

    N, C, H, W = 2, 4, 16, 16
    x = jax.random.normal(kx, (N, C, H, W), dtype=jnp.float32)

    # Deterministic parameter init for fc = Conv2d(C, C, 1, bias=True):
    # weight shape (C, C, 1, 1) -> squeeze to (C, C); uniform in [-1/sqrt(C), 1/sqrt(C)]
    bound = 1.0 / (C ** 0.5)
    weight = jax.random.uniform(kw, (C, C), jnp.float32, -bound, bound)
    bias = jax.random.uniform(kb, (C,), jnp.float32, -bound, bound)

    out = channel_attention(x, weight, bias)
    jax.block_until_ready(out)

    ref = _reference(x, weight, bias)
    assert out.shape == x.shape and out.dtype == x.dtype
    assert jnp.allclose(out, ref, atol=1e-5, rtol=1e-5), "mismatch vs reference"

    print("KERNEL_OK")
</pallas_src>

<mosaic_0001>
module attributes {stable_mosaic.version = 11 : i64} {
  func.func @_pool_kernel(%arg0: i32, %arg1: i32, %arg2: memref<8x256xf32, #tpu.memory_space<vmem>>, %arg3: memref<8x1xf32, #tpu.memory_space<vmem>>) attributes {dimension_semantics = [#tpu.dimension_semantics<parallel>, #tpu.dimension_semantics<arbitrary>], iteration_bounds = array<i64: 1, 1>, scalar_prefetch = 0 : i64, scratch_operands = 0 : i64, tpu.core_type = #tpu.core_type<tc>, window_params = [{transform_indices = @transform_0, window_bounds = array<i64: 8, 256>}, {transform_indices = @transform_1, window_bounds = array<i64: 8, 1>}]} {
    %c0_i32 = arith.constant 0 : i32
    %0 = arith.cmpi eq, %arg1, %c0_i32 : i32
    %1 = arith.extui %0 : i1 to i32
    %c0_i32_0 = arith.constant 0 : i32
    %2 = arith.cmpi ne, %1, %c0_i32_0 : i32
    scf.if %2 {
      %cst_8 = arith.constant 0.000000e+00 : f32
      %12 = vector.broadcast %cst_8 : f32 to vector<8x1xf32>
      %c0_9 = arith.constant 0 : index
      %c0_10 = arith.constant 0 : index
      %13 = vector.load %arg3[%c0_9, %c0_10] : memref<8x1xf32, #tpu.memory_space<vmem>>, vector<8x1xf32>
      tpu.vector_store %arg3[%c0_9, %c0_10], %12 {strides = array<i32>} : memref<8x1xf32, #tpu.memory_space<vmem>>, vector<8x1xf32>,
    } else {
    }
    %c0 = arith.constant 0 : index
    %c0_1 = arith.constant 0 : index
    %3 = vector.load %arg3[%c0, %c0_1] : memref<8x1xf32, #tpu.memory_space<vmem>>, vector<8x1xf32>
    %c0_2 = arith.constant 0 : index
    %c0_3 = arith.constant 0 : index
    %4 = vector.load %arg2[%c0_2, %c0_3] : memref<8x256xf32, #tpu.memory_space<vmem>>, vector<8x256xf32>
    %cst = arith.constant dense<0.000000e+00> : vector<8xf32>
    %5 = vector.multi_reduction <add>, %4, %cst [1] : vector<8x256xf32> to vector<8xf32>
    %6 = vector.shape_cast %5 : vector<8xf32> to vector<8x1xf32>
    %7 = arith.addf %3, %6 : vector<8x1xf32>
    %c0_4 = arith.constant 0 : index
    %c0_5 = arith.constant 0 : index
    %8 = vector.load %arg3[%c0_4, %c0_5] : memref<8x1xf32, #tpu.memory_space<vmem>>, vector<8x1xf32>
    tpu.vector_store %arg3[%c0_4, %c0_5], %7 {strides = array<i32>} : memref<8x1xf32, #tpu.memory_space<vmem>>, vector<8x1xf32>,
    %c0_i32_6 = arith.constant 0 : i32
    %9 = arith.cmpi eq, %arg1, %c0_i32_6 : i32
    %10 = arith.extui %9 : i1 to i32
    %c0_i32_7 = arith.constant 0 : i32
    %11 = arith.cmpi ne, %10, %c0_i32_7 : i32
    scf.if %11 {
      %c0_8 = arith.constant 0 : index
      %c0_9 = arith.constant 0 : index
      %12 = vector.load %arg3[%c0_8, %c0_9] : memref<8x1xf32, #tpu.memory_space<vmem>>, vector<8x1xf32>
      %cst_10 = arith.constant 3.906250e-03 : f32
      %13 = vector.broadcast %cst_10 : f32 to vector<8x1xf32>
      %14 = arith.mulf %12, %13 : vector<8x1xf32>
      %c0_11 = arith.constant 0 : index
      %c0_12 = arith.constant 0 : index
      %15 = vector.load %arg3[%c0_11, %c0_12] : memref<8x1xf32, #tpu.memory_space<vmem>>, vector<8x1xf32>
      tpu.vector_store %arg3[%c0_11, %c0_12], %14 {strides = array<i32>} : memref<8x1xf32, #tpu.memory_space<vmem>>, vector<8x1xf32>,
    } else {
    }
    return
  }
  func.func @transform_0(%arg0: i32, %arg1: i32) -> (i32, i32) {
    %c0_i32 = arith.constant 0 : i32
    return %arg0, %arg1 : i32, i32
  }
  func.func @transform_1(%arg0: i32, %arg1: i32) -> (i32, i32) {
    %c0_i32 = arith.constant 0 : i32
    %c0_i32_0 = arith.constant 0 : i32
    return %arg0, %c0_i32 : i32, i32
  }
}

</mosaic_0001>

<llo_original>
// kernel: tpu_custom_call.1
$region0: #{tpu_custom_call.1}
  #allocation0 [shape = 'u32[]', space=smem, size = 0x4, offset = 0x4, fixed_abs, tag = 'smem constant byte address 0x4 - core index']
  #allocation1 [shape = 'u32[144,128]{1,0:T(1,128)}', space=vmem, size = 0x12000, scoped, tag = 'internal scratch']
  %s0 = inlined_call_operand.hbm [shape: f32[8,256], index: 0, kind: input, shape index: {}]
  %s1 = inlined_call_operand.vmem [shape: f32[8,1], index: 1, kind: output, shape index: {}]
  %s2 = sld [smem:[#allocation0]]
  $region26: #{tpu_custom_call.1} parent=0
    _
  %s4 = ssub.s32 1, %s2
  %s5 = scalar_select 0, %s4, %s2
  $region1: #{tpu_custom_call.1} parent=0
    #allocation2 [shape = 'u8[8192]{0}', space=vmem, size = 0x2000, scoped, tag = 'input window, operand 0, single buffered']
    #allocation3 [shape = 's32[1]{0}', space=sflag, size = 0x4, scoped, tag = 'scoped memory for tpu_custom_call.1']
    %6 = vsyncpa [#allocation3], 0
    // Predicated region
    $region2: #{tpu_custom_call.1} parent=1 // pred_check
      _
    $region3: #{tpu_custom_call.1} parent=1 // pred_check_branch
      %8 = sbr.rel (0) target = $region5
    $region4: #{tpu_custom_call.1} parent=1 // pred_region
      %s10 = ssub.s32 256, 256
      %11 = vsyncadd [#allocation3], %s10
      %s13 = sshll.u32 [#allocation2], 4
      %s14 = int_to_ptr.vmem [resolvable:$true] %s13
      %16 = dma.hbm_to_vmem [thread:$0]  %s0, 256, %s14, [#allocation3]
    $region5: #{tpu_custom_call.1} parent=1 // pred_fallthru
      _
    // Predicated region
    $region6: #{tpu_custom_call.1} parent=1 // pred_check
      _
    $region7: #{tpu_custom_call.1} parent=1 // pred_check_branch
      %18 = sbr.rel (0) target = $region9
    $region8: #{tpu_custom_call.1} parent=1 // pred_region
      %19 = dma.done [#allocation3], 256
    $region9: #{tpu_custom_call.1} parent=1 // pred_fallthru
      _
    %p20 = scmp.eq.s32.totalorder 0, 0
    // Predicated region
    $region10: #{tpu_custom_call.1} parent=1 // pred_check
      %p21 = pneg %p20
    $region11: #{tpu_custom_call.1} parent=1 // pred_check_branch
      %23 = sbr.rel (%p21) target = $region13
    $region12: #{tpu_custom_call.1} parent=1 // pred_region
      %vm24 = vcmask 7168
      %25 = vst.msk [vmem:[%s1] sm:$0xff] %vm24, 0.0
    $region13: #{tpu_custom_call.1} parent=1 // pred_fallthru
      _
    %v26 = vld [vmem:[%s1] sm:$0xff]
    %v27 = vld [vmem:[#allocation2] sm:$0xff]
    %v28 = vld [vmem:[#allocation2 + $0x8] sm:$0xff]
    %v29 = vadd.f32 %v27, %v28
    %30 = vadd.xlane.f32.xlu0 %v29
    %v31 = vpop.xlane.xlu0 %30
    %v32 = vadd.f32 %v26, %v31
    %vm33 = vcmask 7168
    %34 = vst.msk [vmem:[%s1] sm:$0xff] %vm33, %v32
    // Predicated region
    $region14: #{tpu_custom_call.1} parent=1 // pred_check
      %p35 = pneg %p20
    $region15: #{tpu_custom_call.1} parent=1 // pred_check_branch
      %37 = sbr.rel (%p35) target = $region17
    $region16: #{tpu_custom_call.1} parent=1 // pred_region
      %v38 = vld [vmem:[%s1] sm:$0xff]
      %v39 = vmul.f32 %v38, 0.00390625
      %40 = vst.msk [vmem:[%s1] sm:$0xff] %vm33, %v39
    $region17: #{tpu_custom_call.1} parent=1 // pred_fallthru
      _
    // Predicated region
    $region18: #{tpu_custom_call.1} parent=1 // pred_check
      _
    $region19: #{tpu_custom_call.1} parent=1 // pred_check_branch
      %42 = sbr.rel (0) target = $region21
    $region20: #{tpu_custom_call.1} parent=1 // pred_region
      _
    $region21: #{tpu_custom_call.1} parent=1 // pred_fallthru
      _
    // Predicated region
    $region22: #{tpu_custom_call.1} parent=1 // pred_check
      _
    $region23: #{tpu_custom_call.1} parent=1 // pred_check_branch
      %44 = sbr.rel (0) target = $region25
    $region24: #{tpu_custom_call.1} parent=1 // pred_region
      _
    $region25: #{tpu_custom_call.1} parent=1 // pred_fallthru
      _
    %45 = vsyncpa [#allocation3], 1

</llo_original>
